<compile_context>
chip_gen: v7x
topology: tpu7x:2x2x1
jax: 0.10.0
libtpu: 0.0.40
codegen_flags: <defaults>
</compile_context>

<pallas_src>
import math

import jax
import jax.numpy as jnp
from jax import lax
from jax.experimental import pallas as pl
from jax.experimental.pallas import tpu as pltpu


# ---------------------------------------------------------------------------
# Fused sequence kernel: all T cell steps in ONE invocation (no grid)
# ---------------------------------------------------------------------------
def lstm_seq_kernel(x_ref, wih_ref, whh_ref, b_ref, h0_ref, c0_ref,
                    out_ref, pre_sc):
    """x_ref: (T, I), wih_ref: (I, 4H), whh_ref: (H, 4H), b_ref: (1, 4H),
    h0_ref/c0_ref: (1, H), out_ref: (T, 1, 4H) packed rows [h | c | o | 0],
    pre_sc: (T, 4H) VMEM scratch for the hoisted input projection."""
    T = x_ref.shape[0]
    H = h0_ref.shape[-1]

    # Hoisted non-recurrent projection: ONE (T, I) @ (I, 4H) MXU matmul + bias
    # instead of T degenerate M=1 mat-vecs on the serial critical path.
    pre_sc[...] = jnp.dot(x_ref[...], wih_ref[...],
                          preferred_element_type=jnp.float32) + b_ref[...]

    whh = whh_ref[...]                 # hoist recurrent-weight load out of loop

    def step(t, carry):
        h, c = carry                                              # (1, H) each
        w_w = pre_sc[pl.ds(t, 1), :] + jnp.dot(
            h, whh, preferred_element_type=jnp.float32)           # (1, 4H)

        # Gate slice order exactly as in the PyTorch forward: i, f, o, g.
        # One fused sigmoid over the i|f|o slab, tanh only on g.
        sig = jax.nn.sigmoid(w_w[:, 0:3 * H])
        i_gate = sig[:, 0 * H:1 * H]
        f_gate = sig[:, 1 * H:2 * H]
        o_gate = sig[:, 2 * H:3 * H]
        g_gate = jnp.tanh(w_w[:, 3 * H:4 * H])

        c_new = f_gate * c + i_gate * g_gate
        h_new = o_gate * jnp.tanh(c_new)

        # Lane-dense packed (1, 4H) row -> one unmasked store per step; the
        # whole output slab is written back to HBM with a single DMA.
        out_ref[t] = jnp.concatenate(
            [h_new, c_new, o_gate, jnp.zeros_like(o_gate)], axis=-1)
        return (h_new, c_new)

    lax.fori_loop(0, T, step, (h0_ref[...], c0_ref[...]), unroll=True)


def _prepare_params(weight_ih, weight_hh, bias_ih, bias_hh):
    """Host-side weight prep — do this ONCE, not per step.
    (For production on v6e/v7x: store the transposed weights in bf16.)"""
    w_ih_t = weight_ih.astype(jnp.float32).T                 # (I, 4H)
    w_hh_t = weight_hh.astype(jnp.float32).T                 # (H, 4H)
    bias = (bias_ih.astype(jnp.float32)
            + bias_hh.astype(jnp.float32)).reshape(1, -1)    # (1, 4H)
    return w_ih_t, w_hh_t, bias


def lstm_sequence(weight_ih, weight_hh, bias_ih, bias_hh, x_seq, hx=None):
    """Applies the cell forward() over x_seq of shape (T, I).
    Returns (h_seq, c_seq, o_seq), each (T, H)."""
    four_h, input_size = weight_ih.shape
    H = four_h // 4
    T = x_seq.shape[0]

    w_ih_t, w_hh_t, bias = _prepare_params(weight_ih, weight_hh,
                                           bias_ih, bias_hh)

    if hx is None:
        z = jnp.zeros((H,), dtype=jnp.float32)
        hx = (z, z)
    h0 = hx[0].astype(jnp.float32).reshape(1, H)
    c0 = hx[1].astype(jnp.float32).reshape(1, H)
    x2 = x_seq.astype(jnp.float32).reshape(T, input_size)

    vmem = pl.BlockSpec(memory_space=pltpu.MemorySpace.VMEM)
    out = pl.pallas_call(
        lstm_seq_kernel,
        out_shape=jax.ShapeDtypeStruct((T, 1, four_h), jnp.float32),
        in_specs=[vmem, vmem, vmem, vmem, vmem, vmem],
        out_specs=vmem,
        scratch_shapes=[pltpu.VMEM((T, four_h), jnp.float32)],
        # Shapes are tiny; when scaling up set
        # compiler_params=pltpu.CompilerParams(vmem_limit_bytes=...)
    )(x2, w_ih_t, w_hh_t, bias, h0, c0)

    out2 = out[:, 0, :]                                       # (T, 4H)
    return out2[:, 0:H], out2[:, H:2 * H], out2[:, 2 * H:3 * H]


def lstm_cell(weight_ih, weight_hh, bias_ih, bias_hh, x, hx=None):
    """Mirror of LstmModule.forward (single step). Returns ((h, c), o) as 1-D
    arrays.  Uses the fused sequence kernel with T=1 so weights are fetched
    once per call instead of once per tiny per-step pallas_call."""
    h_seq, c_seq, o_seq = lstm_sequence(weight_ih, weight_hh, bias_ih, bias_hh,
                                        x.reshape(1, -1), hx=hx)
    return (h_seq[0], c_seq[0]), o_seq[0]


# ---------------------------------------------------------------------------
# Pure-JAX reference (mirrors the PyTorch forward)
# ---------------------------------------------------------------------------
def reference_lstm_cell(weight_ih, weight_hh, bias_ih, bias_hh, x, hx=None):
    four_h = weight_ih.shape[0]
    H = four_h // 4
    if hx is None:
        z = jnp.zeros((H,), dtype=x.dtype)
        hx = (z, z)
    hprev, cprev = hx
    w_w = weight_ih @ x + bias_ih + weight_hh @ hprev + bias_hh
    i = jax.nn.sigmoid(w_w[0 * H:1 * H])
    f = jax.nn.sigmoid(w_w[1 * H:2 * H])
    o = jax.nn.sigmoid(w_w[2 * H:3 * H])
    g = jnp.tanh(w_w[3 * H:4 * H])
    c = f * cprev + i * g
    h = o * jnp.tanh(c)
    return (h, c), o


if __name__ == "__main__":
    input_units = 16
    hidden_units = 32
    num_chunks = 4          # documented 4-gate LSTM semantics (see header note)
    seq_len = 8

    key = jax.random.PRNGKey(0)
    k_wih, k_whh, k_bih, k_bhh, k_x, k_ig = jax.random.split(key, 6)

    stdv = 1.0 / math.sqrt(hidden_units)
    weight_ih = jax.random.uniform(
        k_wih, (num_chunks * hidden_units, input_units),
        minval=-stdv, maxval=stdv, dtype=jnp.float32)
    weight_hh = jax.random.uniform(
        k_whh, (num_chunks * hidden_units, hidden_units),
        minval=-stdv, maxval=stdv, dtype=jnp.float32)
    bias_ih = jax.random.uniform(
        k_bih, (num_chunks * hidden_units,),
        minval=-stdv, maxval=stdv, dtype=jnp.float32)
    bias_hh = jax.random.uniform(
        k_bhh, (num_chunks * hidden_units,),
        minval=-stdv, maxval=stdv, dtype=jnp.float32)
    igate = jax.random.uniform(k_ig, (), minval=0.0, maxval=1.0)  # unused in forward math

    x_seq = jax.random.normal(k_x, (seq_len, input_units), dtype=jnp.float32)
    x = x_seq[0]

    # ---- single cell step (matches LstmModule.forward) ----
    (h, c), o = lstm_cell(weight_ih, weight_hh, bias_ih, bias_hh, x, hx=None)
    jax.block_until_ready((h, c, o))

    (h_ref, c_ref), o_ref = reference_lstm_cell(
        weight_ih, weight_hh, bias_ih, bias_hh, x, hx=None)

    assert h.shape == (hidden_units,)
    assert c.shape == (hidden_units,)
    assert o.shape == (hidden_units,)
    assert jnp.allclose(h, h_ref, atol=1e-5, rtol=1e-5)
    assert jnp.allclose(c, c_ref, atol=1e-5, rtol=1e-5)
    assert jnp.allclose(o, o_ref, atol=1e-5, rtol=1e-5)

    # ---- fused multi-timestep kernel (same cell applied T times) ----
    h_seq, c_seq, o_seq = lstm_sequence(
        weight_ih, weight_hh, bias_ih, bias_hh, x_seq, hx=None)
    jax.block_until_ready((h_seq, c_seq, o_seq))

    hx_t = None
    h_l, c_l, o_l = [], [], []
    for t in range(seq_len):
        (h_t, c_t), o_t = reference_lstm_cell(
            weight_ih, weight_hh, bias_ih, bias_hh, x_seq[t], hx=hx_t)
        hx_t = (h_t, c_t)
        h_l.append(h_t); c_l.append(c_t); o_l.append(o_t)
    h_seq_ref = jnp.stack(h_l); c_seq_ref = jnp.stack(c_l); o_seq_ref = jnp.stack(o_l)

    assert h_seq.shape == (seq_len, hidden_units)
    assert jnp.allclose(h_seq, h_seq_ref, atol=1e-4, rtol=1e-4)
    assert jnp.allclose(c_seq, c_seq_ref, atol=1e-4, rtol=1e-4)
    assert jnp.allclose(o_seq, o_seq_ref, atol=1e-4, rtol=1e-4)

    print("KERNEL_OK")
</pallas_src>

<mosaic_0001>
module attributes {stable_mosaic.version = 11 : i64} {
  func.func @lstm_seq_kernel(%arg0: memref<1x16xf32, #tpu.memory_space<vmem>>, %arg1: memref<16x128xf32, #tpu.memory_space<vmem>>, %arg2: memref<32x128xf32, #tpu.memory_space<vmem>>, %arg3: memref<1x128xf32, #tpu.memory_space<vmem>>, %arg4: memref<1x32xf32, #tpu.memory_space<vmem>>, %arg5: memref<1x32xf32, #tpu.memory_space<vmem>>, %arg6: memref<1x1x128xf32, #tpu.memory_space<vmem>>, %arg7: memref<1x128xf32, #tpu.memory_space<vmem>>) attributes {dimension_semantics = [], scalar_prefetch = 0 : i64, scratch_operands = 1 : i64, tpu.core_type = #tpu.core_type<tc>} {
    %c0 = arith.constant 0 : index
    %c0_0 = arith.constant 0 : index
    %0 = vector.load %arg0[%c0, %c0_0] : memref<1x16xf32, #tpu.memory_space<vmem>>, vector<1x16xf32>
    %c0_1 = arith.constant 0 : index
    %c0_2 = arith.constant 0 : index
    %1 = vector.load %arg1[%c0_1, %c0_2] : memref<16x128xf32, #tpu.memory_space<vmem>>, vector<16x128xf32>
    %cst = arith.constant dense<0.000000e+00> : vector<1x128xf32>
    %2 = tpu.matmul %0, %1, %cst {dimension_numbers = #tpu.dot_dimension_numbers<[1], [0], [0], [1], [0, 0, 1, 1], [], []>} : vector<1x16xf32>, vector<16x128xf32>, vector<1x128xf32> -> vector<1x128xf32>
    %c0_3 = arith.constant 0 : index
    %c0_4 = arith.constant 0 : index
    %3 = vector.load %arg3[%c0_3, %c0_4] : memref<1x128xf32, #tpu.memory_space<vmem>>, vector<1x128xf32>
    %4 = arith.addf %2, %3 : vector<1x128xf32>
    %c0_5 = arith.constant 0 : index
    %c0_6 = arith.constant 0 : index
    %5 = vector.load %arg7[%c0_5, %c0_6] : memref<1x128xf32, #tpu.memory_space<vmem>>, vector<1x128xf32>
    tpu.vector_store %arg7[%c0_5, %c0_6], %4 {strides = array<i32>} : memref<1x128xf32, #tpu.memory_space<vmem>>, vector<1x128xf32>,
    %c0_7 = arith.constant 0 : index
    %c0_8 = arith.constant 0 : index
    %6 = vector.load %arg2[%c0_7, %c0_8] : memref<32x128xf32, #tpu.memory_space<vmem>>, vector<32x128xf32>
    %c0_9 = arith.constant 0 : index
    %c0_10 = arith.constant 0 : index
    %7 = vector.load %arg4[%c0_9, %c0_10] : memref<1x32xf32, #tpu.memory_space<vmem>>, vector<1x32xf32>
    %c0_11 = arith.constant 0 : index
    %c0_12 = arith.constant 0 : index
    %8 = vector.load %arg5[%c0_11, %c0_12] : memref<1x32xf32, #tpu.memory_space<vmem>>, vector<1x32xf32>
    %c0_i32 = arith.constant 0 : i32
    %9 = arith.index_cast %c0_i32 : i32 to index
    %c0_13 = arith.constant 0 : index
    %10 = vector.load %arg7[%9, %c0_13] : memref<1x128xf32, #tpu.memory_space<vmem>>, vector<1x128xf32>
    %cst_14 = arith.constant dense<0.000000e+00> : vector<1x128xf32>
    %11 = tpu.matmul %7, %6, %cst_14 {dimension_numbers = #tpu.dot_dimension_numbers<[1], [0], [0], [1], [0, 0, 1, 1], [], []>} : vector<1x32xf32>, vector<32x128xf32>, vector<1x128xf32> -> vector<1x128xf32>
    %12 = arith.addf %10, %11 : vector<1x128xf32>
    %13 = vector.extract_strided_slice %12 {offsets = [0, 0], sizes = [1, 96], strides = [1, 1]} : vector<1x128xf32> to vector<1x96xf32>
    %14 = arith.negf %13 : vector<1x96xf32>
    %15 = math.exp %14 : vector<1x96xf32>
    %cst_15 = arith.constant 1.000000e+00 : f32
    %16 = vector.broadcast %cst_15 : f32 to vector<1x96xf32>
    %17 = arith.addf %16, %15 : vector<1x96xf32>
    %18 = arith.divf %16, %17 : vector<1x96xf32>
    %19 = vector.extract_strided_slice %18 {offsets = [0, 0], sizes = [1, 32], strides = [1, 1]} : vector<1x96xf32> to vector<1x32xf32>
    %20 = vector.extract_strided_slice %18 {offsets = [0, 32], sizes = [1, 32], strides = [1, 1]} : vector<1x96xf32> to vector<1x32xf32>
    %21 = vector.extract_strided_slice %18 {offsets = [0, 64], sizes = [1, 32], strides = [1, 1]} : vector<1x96xf32> to vector<1x32xf32>
    %22 = vector.extract_strided_slice %12 {offsets = [0, 96], sizes = [1, 32], strides = [1, 1]} : vector<1x128xf32> to vector<1x32xf32>
    %23 = math.tanh %22 : vector<1x32xf32>
    %24 = arith.mulf %20, %8 : vector<1x32xf32>
    %25 = arith.mulf %19, %23 : vector<1x32xf32>
    %26 = arith.addf %24, %25 : vector<1x32xf32>
    %27 = math.tanh %26 : vector<1x32xf32>
    %28 = arith.mulf %21, %27 : vector<1x32xf32>
    %cst_16 = arith.constant 0.000000e+00 : f32
    %29 = vector.broadcast %cst_16 : f32 to vector<1x32xf32>
    %30 = tpu.concatenate %28, %26, %21, %29 in 1 : vector<1x32xf32>, vector<1x32xf32>, vector<1x32xf32>, vector<1x32xf32> -> vector<1x128xf32>
    %31 = arith.index_cast %c0_i32 : i32 to index
    %c0_17 = arith.constant 0 : index
    %c0_18 = arith.constant 0 : index
    %32 = vector.load %arg6[%31, %c0_17, %c0_18] : memref<1x1x128xf32, #tpu.memory_space<vmem>>, vector<1x1x128xf32>
    %33 = vector.shape_cast %32 : vector<1x1x128xf32> to vector<1x128xf32>
    %34 = vector.shape_cast %30 : vector<1x128xf32> to vector<1x1x128xf32>
    tpu.vector_store %arg6[%31, %c0_17, %c0_18], %34 {strides = array<i32>} : memref<1x1x128xf32, #tpu.memory_space<vmem>>, vector<1x1x128xf32>,
    %c1_i32 = arith.constant 1 : i32
    return
  }
}

</mosaic_0001>

<llo_original>
// kernel: tpu_custom_call.1
$region0: #{tpu_custom_call.1}
  #allocation0 [shape = 'u32[]', space=smem, size = 0x4, offset = 0x4, fixed_abs, tag = 'smem constant byte address 0x4 - core index']
  #allocation1 [shape = 'u32[144,128]{1,0:T(1,128)}', space=vmem, size = 0x12000, scoped, tag = 'internal scratch']
  #allocation2 [shape = 'f32[1,128]{1,0:T(1,128)}', space=vmem, size = 0x200, scoped, tag = 'scratch operand']
  %s0 = inlined_call_operand.hbm [shape: f32[1,16], index: 0, kind: input, shape index: {}]
  %s1 = inlined_call_operand.hbm [shape: f32[16,128], index: 1, kind: input, shape index: {}]
  %s2 = inlined_call_operand.hbm [shape: f32[32,128], index: 2, kind: input, shape index: {}]
  %s3 = inlined_call_operand.vmem [shape: f32[1,128], index: 3, kind: input, shape index: {}]
  %s4 = inlined_call_operand.vmem [shape: f32[1,32], index: 4, kind: input, shape index: {}]
  %s5 = inlined_call_operand.vmem [shape: f32[1,32], index: 5, kind: input, shape index: {}]
  %s6 = inlined_call_operand.hbm [shape: f32[1,1,128], index: 6, kind: output, shape index: {}]
  %s7 = sld [smem:[#allocation0]]
  $region46: #{tpu_custom_call.1} parent=0
    _
  %s9 = ssub.s32 1, %s7
  %s10 = scalar_select 0, %s9, %s7
  $region1: #{tpu_custom_call.1} parent=0
    #allocation3 [shape = 'u8[512]{0}', space=vmem, size = 0x400, scoped, tag = 'input window, operand 0, single buffered']
    #allocation4 [shape = 's32[1]{0}', space=sflag, size = 0x4, scoped, tag = 'scoped memory for tpu_custom_call.1']
    #allocation5 [shape = 's32[1]{0}', space=sflag, size = 0x4, scoped, tag = 'scoped memory for tpu_custom_call.1']
    #allocation6 [shape = 'u8[8192]{0}', space=vmem, size = 0x2000, scoped, tag = 'input window, operand 1, single buffered']
    #allocation7 [shape = 's32[1]{0}', space=sflag, size = 0x4, scoped, tag = 'scoped memory for tpu_custom_call.1']
    #allocation8 [shape = 'u8[16384]{0}', space=vmem, size = 0x4000, scoped, tag = 'input window, operand 2, single buffered']
    #allocation9 [shape = 'u8[512]{0}', space=vmem, size = 0x400, scoped, tag = 'output window, operand 0, single buffered']
    %11 = vsyncpa [#allocation4], 0
    %12 = vsyncpa [#allocation7], 0
    %13 = vsyncpa [#allocation5], 0
    // Predicated region
    $region2: #{tpu_custom_call.1} parent=1 // pred_check
      _
    $region3: #{tpu_custom_call.1} parent=1 // pred_check_branch
      %15 = sbr.rel (0) target = $region5
    $region4: #{tpu_custom_call.1} parent=1 // pred_region
      %s17 = ssub.s32 16, 16
      %18 = vsyncadd [#allocation4], %s17
      %s20 = sshll.u32 [#allocation3], 4
      %s21 = int_to_ptr.vmem [resolvable:$true] %s20
      %23 = dma.hbm_to_vmem [thread:$0]  %s0, 16, %s21, [#allocation4]
    $region5: #{tpu_custom_call.1} parent=1 // pred_fallthru
      _
    // Predicated region
    $region6: #{tpu_custom_call.1} parent=1 // pred_check
      _
    $region7: #{tpu_custom_call.1} parent=1 // pred_check_branch
      %25 = sbr.rel (0) target = $region9
    $region8: #{tpu_custom_call.1} parent=1 // pred_region
      %s27 = ssub.s32 256, 256
      %28 = vsyncadd [#allocation7], %s27
      %s29 = sshll.u32 [#allocation6], 4
      %s30 = int_to_ptr.vmem [resolvable:$true] %s29
      %35 = dma.hbm_to_vmem [thread:$0]  %s1, 256, %s30, [#allocation7], 128, 128, 8
    $region9: #{tpu_custom_call.1} parent=1 // pred_fallthru
      _
    // Predicated region
    $region10: #{tpu_custom_call.1} parent=1 // pred_check
      _
    $region11: #{tpu_custom_call.1} parent=1 // pred_check_branch
      %37 = sbr.rel (0) target = $region13
    $region12: #{tpu_custom_call.1} parent=1 // pred_region
      %s39 = ssub.s32 512, 512
      %40 = vsyncadd [#allocation7], %s39
      %s41 = sshll.u32 [#allocation8], 4
      %s42 = int_to_ptr.vmem [resolvable:$true] %s41
      %47 = dma.hbm_to_vmem [thread:$0]  %s2, 512, %s42, [#allocation7], 128, 128, 8
    $region13: #{tpu_custom_call.1} parent=1 // pred_fallthru
      _
    // Predicated region
    $region14: #{tpu_custom_call.1} parent=1 // pred_check
      _
    $region15: #{tpu_custom_call.1} parent=1 // pred_check_branch
      %49 = sbr.rel (0) target = $region17
    $region16: #{tpu_custom_call.1} parent=1 // pred_region
      _
    $region17: #{tpu_custom_call.1} parent=1 // pred_fallthru
      _
    // Predicated region
    $region18: #{tpu_custom_call.1} parent=1 // pred_check
      _
    $region19: #{tpu_custom_call.1} parent=1 // pred_check_branch
      %51 = sbr.rel (0) target = $region21
    $region20: #{tpu_custom_call.1} parent=1 // pred_region
      _
    $region21: #{tpu_custom_call.1} parent=1 // pred_fallthru
      _
    // Predicated region
    $region22: #{tpu_custom_call.1} parent=1 // pred_check
      _
    $region23: #{tpu_custom_call.1} parent=1 // pred_check_branch
      %53 = sbr.rel (0) target = $region25
    $region24: #{tpu_custom_call.1} parent=1 // pred_region
      _
    $region25: #{tpu_custom_call.1} parent=1 // pred_fallthru
      _
    // Predicated region
    $region26: #{tpu_custom_call.1} parent=1 // pred_check
      _
    $region27: #{tpu_custom_call.1} parent=1 // pred_check_branch
      %55 = sbr.rel (0) target = $region29
    $region28: #{tpu_custom_call.1} parent=1 // pred_region
      %56 = dma.done [#allocation4], 16
    $region29: #{tpu_custom_call.1} parent=1 // pred_fallthru
      _
    // Predicated region
    $region30: #{tpu_custom_call.1} parent=1 // pred_check
      _
    $region31: #{tpu_custom_call.1} parent=1 // pred_check_branch
      %58 = sbr.rel (0) target = $region33
    $region32: #{tpu_custom_call.1} parent=1 // pred_region
      %59 = dma.done [#allocation7], 256
    $region33: #{tpu_custom_call.1} parent=1 // pred_fallthru
      _
    // Predicated region
    $region34: #{tpu_custom_call.1} parent=1 // pred_check
      _
    $region35: #{tpu_custom_call.1} parent=1 // pred_check_branch
      %61 = sbr.rel (0) target = $region37
    $region36: #{tpu_custom_call.1} parent=1 // pred_region
      %62 = dma.done [#allocation7], 512
    $region37: #{tpu_custom_call.1} parent=1 // pred_fallthru
      _
    %v63 = vld [vmem:[#allocation3] sm:$0x1]
    %v64 = vld [vmem:[#allocation6] sm:$0xff]
    %v65 = vld [vmem:[#allocation6 + $0x8] sm:$0xff]
    %v66 = vld [vmem:[%s3] sm:$0x1]
    %vm67 = vcmask 130048
    %v69 = vsel %vm67, %v63, 0
    %71 = vmatprep.subr.mxu0 0.0
    %72 = vmatpush1.msra.mxu0 %v64
    %73 = vmatprep.subr.mxu0 0.0
    %74 = vmatpush1.msra.mxu0 %v65
    %75 = vmatprep.subr.mxu0 0.0
    %76 = vmatpush1.msra.mxu0 0.0
    %77 = vmatprep.subr.mxu0 0.0
    %78 = vmatpush1.msra.mxu0 0.0
    %79 = vmatprep.subr.mxu0 0.0
    %80 = vmatpush1.msra.mxu0 0.0
    %81 = vmatprep.subr.mxu0 0.0
    %82 = vmatpush1.msra.mxu0 0.0
    %83 = vmatprep.subr.mxu0 0.0
    %84 = vmatpush1.msra.mxu0 0.0
    %85 = vmatprep.subr.mxu0 0.0
    %86 = vmatpush1.msra.mxu0 0.0
    %87 = vmatprep.subr.mxu0 0.0
    %88 = vmatpush1.msra.mxu0 0.0
    %89 = vmatprep.subr.mxu0 0.0
    %90 = vmatpush1.msra.mxu0 0.0
    %91 = vmatprep.subr.mxu0 0.0
    %92 = vmatpush1.msra.mxu0 0.0
    %93 = vmatprep.subr.mxu0 0.0
    %94 = vmatpush1.msra.mxu0 0.0
    %95 = vmatprep.subr.mxu0 0.0
    %96 = vmatpush1.msra.mxu0 0.0
    %97 = vmatprep.subr.mxu0 0.0
    %98 = vmatpush1.msra.mxu0 0.0
    %99 = vmatprep.subr.mxu0 0.0
    %100 = vmatpush1.msra.mxu0 0.0
    %101 = vmatprep.subr.mxu0 0.0
    %102 = vmatpush1.msra.mxu0 0.0
    %103 = vmatprep.subr.mxu0 0.0
    %104 = vmatpush1.msra.mxu0 0.0
    %105 = vmatprep.subr.mxu0 0.0
    %106 = vmatpush1.msra.mxu0 0.0
    %107 = vmatprep.subr.mxu0 0.0
    %108 = vmatpush1.msra.mxu0 0.0
    %109 = vmatprep.subr.mxu0 0.0
    %110 = vmatpush1.msra.mxu0 0.0
    %111 = vmatprep.subr.mxu0 0.0
    %112 = vmatpush1.msra.mxu0 0.0
    %113 = vmatprep.subr.mxu0 0.0
    %114 = vmatpush1.msra.mxu0 0.0
    %115 = vmatprep.subr.mxu0 0.0
    %116 = vmatpush1.msra.mxu0 0.0
    %117 = vmatprep.subr.mxu0 0.0
    %118 = vmatpush1.msra.mxu0 0.0
    %119 = vmatprep.subr.mxu0 0.0
    %120 = vmatpush1.msra.mxu0 0.0
    %121 = vmatprep.subr.mxu0 0.0
    %122 = vmatpush1.msra.mxu0 0.0
    %123 = vmatprep.subr.mxu0 0.0
    %124 = vmatpush1.msra.mxu0 0.0
    %125 = vmatprep.subr.mxu0 0.0
    %126 = vmatpush1.msra.mxu0 0.0
    %127 = vmatprep.subr.mxu0 0.0
    %128 = vmatpush1.msra.mxu0 0.0
    %129 = vmatprep.subr.mxu0 0.0
    %130 = vmatpush1.msra.mxu0 0.0
    %131 = vmatprep.subr.mxu0 0.0
    %132 = vmatpush1.msra.mxu0 0.0
    %133 = vmatprep.subr.mxu0 0.0
    %134 = vmatpush1.msra.mxu0 0.0
    %135 = vmatprep.mubr.f32.mxu0 0.0
    %136 = vmatmul.mubr.f32.gmra.mrb[0].mxu0 %v69
    %v137 = vpop.f32.mrb[0].mxu0
    %v138 = vadd.f32 %v66, %v137
    %v139 = vpop.f32.mrb[0].mxu0
    %140 = vdwg.mxu0
    %141 = vst [vmem:[#allocation2] sm:$0x1] %v138
    %v142 = vld [vmem:[#allocation8] sm:$0xff]
    %v143 = vld [vmem:[#allocation8 + $0x8] sm:$0xff]
    %v144 = vld [vmem:[#allocation8 + $0x10] sm:$0xff]
    %v145 = vld [vmem:[#allocation8 + $0x18] sm:$0xff]
    %v146 = vld [vmem:[%s4] sm:$0x1]
    %v147 = vld [vmem:[%s5] sm:$0x1]
    %v148 = vld [vmem:[#allocation2] sm:$0x1]
    %vm149 = vcmask 261120
    %v151 = vsel %vm149, %v146, 0
    %153 = vmatprep.subr.mxu0 0.0
    %154 = vmatpush1.msra.mxu0 %v142
    %155 = vmatprep.subr.mxu0 0.0
    %156 = vmatpush1.msra.mxu0 %v143
    %157 = vmatprep.subr.mxu0 0.0
    %158 = vmatpush1.msra.mxu0 %v144
    %159 = vmatprep.subr.mxu0 0.0
    %160 = vmatpush1.msra.mxu0 %v145
    %161 = vmatprep.subr.mxu0 0.0
    %162 = vmatpush1.msra.mxu0 0.0
    %163 = vmatprep.subr.mxu0 0.0
    %164 = vmatpush1.msra.mxu0 0.0
    %165 = vmatprep.subr.mxu0 0.0
    %166 = vmatpush1.msra.mxu0 0.0
    %167 = vmatprep.subr.mxu0 0.0
    %168 = vmatpush1.msra.mxu0 0.0
    %169 = vmatprep.subr.mxu0 0.0
    %170 = vmatpush1.msra.mxu0 0.0
    %171 = vmatprep.subr.mxu0 0.0
    %172 = vmatpush1.msra.mxu0 0.0
    %173 = vmatprep.subr.mxu0 0.0
    %174 = vmatpush1.msra.mxu0 0.0
    %175 = vmatprep.subr.mxu0 0.0
    %176 = vmatpush1.msra.mxu0 0.0
    %177 = vmatprep.subr.mxu0 0.0
    %178 = vmatpush1.msra.mxu0 0.0
    %179 = vmatprep.subr.mxu0 0.0
    %180 = vmatpush1.msra.mxu0 0.0
    %181 = vmatprep.subr.mxu0 0.0
    %182 = vmatpush1.msra.mxu0 0.0
    %183 = vmatprep.subr.mxu0 0.0
    %184 = vmatpush1.msra.mxu0 0.0
    %185 = vmatprep.subr.mxu0 0.0
    %186 = vmatpush1.msra.mxu0 0.0
    %187 = vmatprep.subr.mxu0 0.0
    %188 = vmatpush1.msra.mxu0 0.0
    %189 = vmatprep.subr.mxu0 0.0
    %190 = vmatpush1.msra.mxu0 0.0
    %191 = vmatprep.subr.mxu0 0.0
    %192 = vmatpush1.msra.mxu0 0.0
    %193 = vmatprep.subr.mxu0 0.0
    %194 = vmatpush1.msra.mxu0 0.0
    %195 = vmatprep.subr.mxu0 0.0
    %196 = vmatpush1.msra.mxu0 0.0
    %197 = vmatprep.subr.mxu0 0.0
    %198 = vmatpush1.msra.mxu0 0.0
    %199 = vmatprep.subr.mxu0 0.0
    %200 = vmatpush1.msra.mxu0 0.0
    %201 = vmatprep.subr.mxu0 0.0
    %202 = vmatpush1.msra.mxu0 0.0
    %203 = vmatprep.subr.mxu0 0.0
    %204 = vmatpush1.msra.mxu0 0.0
    %205 = vmatprep.subr.mxu0 0.0
    %206 = vmatpush1.msra.mxu0 0.0
    %207 = vmatprep.subr.mxu0 0.0
    %208 = vmatpush1.msra.mxu0 0.0
    %209 = vmatprep.subr.mxu0 0.0
    %210 = vmatpush1.msra.mxu0 0.0
    %211 = vmatprep.subr.mxu0 0.0
    %212 = vmatpush1.msra.mxu0 0.0
    %213 = vmatprep.subr.mxu0 0.0
    %214 = vmatpush1.msra.mxu0 0.0
    %215 = vmatprep.subr.mxu0 0.0
    %216 = vmatpush1.msra.mxu0 0.0
    %217 = vmatprep.mubr.f32.mxu0 0.0
    %218 = vmatmul.mubr.f32.gmra.mrb[0].mxu0 %v151
    %v219 = vpop.f32.mrb[0].mxu0
    %v220 = vadd.f32 0.0, %v219
    %v221 = vpop.f32.mrb[0].mxu0
    %222 = vdwg.mxu0
    %v223 = vadd.f32 %v148, %v220
    %v224 = vxor.u32 %v223, 2147483648
    %v225 = vmul.f32 %v224, 1.442695
    %v226 = vpow.pop %v225
    %v227 = vadd.f32 %v226, 1.0
    %v228 = vrcp.pop %v227
    %v229 = vmul.f32 1.0, %v228
    %v230 = vtanh.pop %v223
    %232 = vrot.lane.b32.xlu0 %v147, 32
    %v233 = vpop.permute.xlu0 %232
    %v235 = vmul.f32 %v229, %v233
    %237 = vrot.lane.b32.xlu0 %v230, 32
    %v238 = vpop.permute.xlu0 %237
    %v240 = vmul.f32 %v229, %v238
    %242 = vrot.lane.b32.xlu0 %v240, 32
    %v243 = vpop.permute.xlu0 %242
    %v245 = vadd.f32 %v235, %v243
    %v246 = vtanh.pop %v245
    %248 = vrot.lane.b32.xlu0 %v246, 32
    %v249 = vpop.permute.xlu0 %248
    %v251 = vmul.f32 %v229, %v249
    %v253 = vlaneseq
    %v254 = vshrl.u32 %v253, 7
    %v255 = vsub.s32 0, %v254
    %v256 = vrot.slane %v251, %v255
    %257 = vrot.lane.b32.xlu0 %v256, 64
    %v258 = vpop.permute.xlu0 %257
    %v260 = vsel %vm149, %v258, %v245
    %vm261 = vcmask 523264
    %v262 = vsel %vm261, %v260, %v229
    %vm263 = vcmask 785408
    %v264 = vsel %vm263, %v262, 0.0
    %265 = vst [vmem:[#allocation9] sm:$0x1] %v264
    // Predicated region
    $region38: #{tpu_custom_call.1} parent=1 // pred_check
      _
    $region39: #{tpu_custom_call.1} parent=1 // pred_check_branch
      %267 = sbr.rel (0) target = $region41
    $region40: #{tpu_custom_call.1} parent=1 // pred_region
      %s269 = ssub.s32 16, 16
      %270 = vsyncadd [#allocation5], %s269
      %s272 = sshll.u32 [#allocation9], 4
      %s273 = int_to_ptr.vmem [resolvable:$true] %s272
      %275 = dma.vmem_to_hbm [thread:$0]  %s273, 16, %s6, [#allocation5]
    $region41: #{tpu_custom_call.1} parent=1 // pred_fallthru
      _
    // Predicated region
    $region42: #{tpu_custom_call.1} parent=1 // pred_check
      _
    $region43: #{tpu_custom_call.1} parent=1 // pred_check_branch
      %277 = sbr.rel (0) target = $region45
    $region44: #{tpu_custom_call.1} parent=1 // pred_region
      %278 = dma.done [#allocation5], 16
    $region45: #{tpu_custom_call.1} parent=1 // pred_fallthru
      _
    %279 = vsyncpa [#allocation4], 1
    %280 = vsyncpa [#allocation7], 1
    %281 = vsyncpa [#allocation5], 1

</llo_original>
